<compile_context>
chip_gen: v6e
topology: v6e:2x2x1
jax: 0.10.0
libtpu: 0.0.40
codegen_flags: <defaults>
</compile_context>

<pallas_src>
import jax
import jax.numpy as jnp
from jax.experimental import pallas as pl
from jax.experimental.pallas import tpu as pltpu


# ---------------------------------------------------------------------------
# Kernels
# ---------------------------------------------------------------------------
def _attn_softmax_kernel(x_ref, xt_ref, attn_ref, acc_ref):
    """Pass 1: accumulate logits over N chunks, softmax at the last chunk.

    x_ref, xt_ref : (TB, D, TN) native-dtype tiles (theta / phi chunks)
    attn_ref      : (TB, D, D) output block (resident across the N-chunk axis)
    acc_ref       : (TB, D, D) f32 VMEM scratch (logit accumulator)
    """
    j = pl.program_id(1)

    @pl.when(j == 0)
    def _init():
        acc_ref[...] = jnp.zeros_like(acc_ref)

    # logits_chunk = theta_chunk @ phi_chunk^T, contracted over the N axis of
    # BOTH operands (dot_general with transposed contraction dims) -> feeds the
    # MXU directly, no xt.T / XLU transpose, f32 accumulation.
    acc_ref[...] += jnp.einsum(
        "bdn,ben->bde",
        x_ref[...],
        xt_ref[...],
        preferred_element_type=jnp.float32,
    )

    @pl.when(j == pl.num_programs(1) - 1)
    def _finalize():
        logits = acc_ref[...]                                   # f32
        m = jnp.max(logits, axis=-1, keepdims=True)
        p = jnp.exp(logits - m)
        denom = jnp.sum(p, axis=-1, keepdims=True)
        # EUP approximate reciprocal + one Newton-Raphson refinement: avoids
        # D*D divides while keeping ~f32 accuracy.
        inv = pl.reciprocal(denom, approx=True)
        inv = inv * (2.0 - denom * inv)
        attn_ref[...] = (p * inv).astype(attn_ref.dtype)


def _attn_apply_kernel(attn_ref, g_ref, o_ref):
    """Pass 2: out_chunk = attn @ g_chunk.

    attn_ref : (TB, D, D) attention (native dtype)
    g_ref    : (TB, D, TN) g chunk  (native dtype)
    o_ref    : (TB, D, TN) output chunk
    """
    out = jnp.einsum(
        "bde,ben->bdn",
        attn_ref[...],
        g_ref[...],
        preferred_element_type=jnp.float32,
    )
    o_ref[...] = out.astype(o_ref.dtype)


# ---------------------------------------------------------------------------
# Tile selection
# ---------------------------------------------------------------------------
def _largest_divisor_leq(n, cap):
    """Largest divisor of n that is <= cap, preferring multiples of 128."""
    cap = max(1, min(n, cap))
    start = (cap // 128) * 128
    for d in range(start, 0, -128):
        if n % d == 0:
            return d
    for d in range(cap, 0, -1):
        if n % d == 0:
            return d
    return 1


def _choose_tiles(B, D, N, elt_bytes, budget_bytes=10 << 20):
    """Pick (TB, TN) so per-step VMEM stays under budget on all generations.

    Budget of ~10 MiB fits comfortably under the default scoped VMEM limits
    (16 MiB v5e, 32 MiB v6e/v7x) including double-buffering, so no
    vmem_limit_bytes override is needed and pipelining stays double-buffered
    even on v7x's 64 MiB parts.
    """
    dd = D * D * (3 * elt_bytes + 4)      # (D,D) attn blocks (x2 buf) + f32 acc
    col_cost = 4 * D * elt_bytes          # double-buffered (D, TN) in/out pairs

    if N < 128:
        tn = N                            # full (allowed even if not 128-aligned)
    else:
        max_cols = max(128, (budget_bytes - dd) // col_cost)
        tn = N if N <= max_cols else _largest_divisor_leq(N, max_cols)
        # BlockSpec lane constraint: last block dim must be a multiple of 128
        # or equal to the full dim.
        if tn != N and tn % 128 != 0:
            tn = N

    def fits(tb):
        return tb * (col_cost * tn + dd) <= budget_bytes

    tb = 1
    for cand in range(B, 0, -1):
        if B % cand == 0 and fits(cand):
            tb = cand
            break
    return tb, tn


# ---------------------------------------------------------------------------
# Wrapper
# ---------------------------------------------------------------------------
def sa_axial_block(x_, x_t, g_x):
    """JAX/Pallas equivalent of saAxialBlock.forward.

    x_, x_t, g_x: arrays of shape (B, D, *spatial) (e.g. NCHW).
    Returns an array with shape (B, D, *g_x.shape[2:]).
    """
    B, D = x_.shape[0], x_.shape[1]
    ori_spatial = g_x.shape[2:]

    x_f = x_.reshape(B, D, -1)
    xt_f = x_t.reshape(B, D, -1)
    g_f = g_x.reshape(B, D, -1)
    N = g_f.shape[-1]
    assert x_f.shape[-1] == N and xt_f.shape[-1] == N

    out_dtype = g_f.dtype
    # Attention stays in the input dtype so the second matmul runs with
    # MXU-native operands (bf16 in, f32 accumulate if inputs are bf16).
    attn_dtype = g_f.dtype
    elt_bytes = max(jnp.dtype(x_f.dtype).itemsize, jnp.dtype(out_dtype).itemsize)

    # NOTE: D is not padded to the sublane tile here because zero-padding the
    # channel axis would add spurious softmax columns unless masked to -inf.
    TB, TN = _choose_tiles(B, D, N, elt_bytes)
    grid = (B // TB, N // TN)

    chunk_spec = pl.BlockSpec((TB, D, TN), lambda b, j: (b, 0, j))
    attn_spec = pl.BlockSpec((TB, D, D), lambda b, j: (b, 0, 0))

    # ---- pass 1: logits accumulation over N chunks + softmax -> (B, D, D) ----
    attn = pl.pallas_call(
        _attn_softmax_kernel,
        out_shape=jax.ShapeDtypeStruct((B, D, D), attn_dtype),
        grid_spec=pltpu.PrefetchScalarGridSpec(
            num_scalar_prefetch=0,
            grid=grid,
            in_specs=[chunk_spec, chunk_spec],
            out_specs=attn_spec,
            scratch_shapes=[pltpu.VMEM((TB, D, D), jnp.float32)],
        ),
        compiler_params=pltpu.CompilerParams(
            # B parallel (megacore sharding on v7x), N-chunk axis is a reduction.
            dimension_semantics=("parallel", "arbitrary"),
        ),
        cost_estimate=pl.CostEstimate(
            flops=2 * B * D * D * N + 4 * B * D * D,
            transcendentals=B * D * D + B * D,
            bytes_accessed=(2 * B * D * N + B * D * D) * elt_bytes,
        ),
    )(x_f, xt_f)

    # ---- pass 2: stream out[:, :, j*TN:(j+1)*TN] = attn @ g_chunk -------------
    out_flat = pl.pallas_call(
        _attn_apply_kernel,
        out_shape=jax.ShapeDtypeStruct((B, D, N), out_dtype),
        grid_spec=pltpu.PrefetchScalarGridSpec(
            num_scalar_prefetch=0,
            grid=grid,
            in_specs=[attn_spec, chunk_spec],
            out_specs=chunk_spec,
            scratch_shapes=[],
        ),
        compiler_params=pltpu.CompilerParams(
            dimension_semantics=("parallel", "parallel"),
        ),
        cost_estimate=pl.CostEstimate(
            flops=2 * B * D * D * N,
            transcendentals=0,
            bytes_accessed=(2 * B * D * N + B * D * D) * elt_bytes,
        ),
    )(attn, g_f)

    return out_flat.reshape(B, D, *ori_spatial)


# ---------------------------------------------------------------------------
# Reference + self-test
# ---------------------------------------------------------------------------
def _reference(x_, x_t, g_x):
    B, D = x_.shape[0], x_.shape[1]
    ori_spatial = g_x.shape[2:]
    x_f = x_.reshape(B, D, -1)
    xt_f = x_t.reshape(B, D, -1)
    g_f = g_x.reshape(B, D, -1)
    attn = jnp.einsum("bdn,ben->bde", x_f, xt_f)
    attn = jax.nn.softmax(attn, axis=-1)
    out = jnp.einsum("bde,ben->bdn", attn, g_f)
    return out.reshape(B, D, *ori_spatial)


if __name__ == "__main__":
    key = jax.random.PRNGKey(0)
    k1, k2, k3 = jax.random.split(key, 3)

    B, D, H, W = 2, 4, 16, 16
    x_ = jax.random.normal(k1, (B, D, H, W), dtype=jnp.float32)
    x_t = jax.random.normal(k2, (B, D, H, W), dtype=jnp.float32)
    g_x = jax.random.normal(k3, (B, D, H, W), dtype=jnp.float32)

    out = sa_axial_block(x_, x_t, g_x)
    out = jax.block_until_ready(out)

    ref = _reference(x_, x_t, g_x)
    assert out.shape == (B, D, H, W), out.shape
    max_err = float(jnp.max(jnp.abs(out - ref)))
    assert jnp.allclose(out, ref, atol=1e-3, rtol=1e-3), max_err

    print("KERNEL_OK")
</pallas_src>

<mosaic_0001>
module attributes {stable_mosaic.version = 11 : i64} {
  func.func @_attn_softmax_kernel(%arg0: i32, %arg1: i32, %arg2: memref<2x4x256xf32, #tpu.memory_space<vmem>>, %arg3: memref<2x4x256xf32, #tpu.memory_space<vmem>>, %arg4: memref<2x4x4xf32, #tpu.memory_space<vmem>>, %arg5: memref<2x4x4xf32, #tpu.memory_space<vmem>>) attributes {dimension_semantics = [#tpu.dimension_semantics<parallel>, #tpu.dimension_semantics<arbitrary>], iteration_bounds = array<i64: 1, 1>, scalar_prefetch = 0 : i64, scratch_operands = 1 : i64, tpu.core_type = #tpu.core_type<tc>, window_params = [{transform_indices = @transform_0, window_bounds = array<i64: 2, 4, 256>}, {transform_indices = @transform_1, window_bounds = array<i64: 2, 4, 256>}, {transform_indices = @transform_2, window_bounds = array<i64: 2, 4, 4>}]} {
    %c0_i32 = arith.constant 0 : i32
    %0 = arith.cmpi eq, %arg1, %c0_i32 : i32
    %1 = arith.extui %0 : i1 to i32
    %c0_i32_0 = arith.constant 0 : i32
    %2 = arith.cmpi ne, %1, %c0_i32_0 : i32
    scf.if %2 {
      %cst_14 = arith.constant 0.000000e+00 : f32
      %12 = vector.broadcast %cst_14 : f32 to vector<2x4x4xf32>
      %c0_15 = arith.constant 0 : index
      %c0_16 = arith.constant 0 : index
      %c0_17 = arith.constant 0 : index
      %13 = vector.load %arg5[%c0_15, %c0_16, %c0_17] : memref<2x4x4xf32, #tpu.memory_space<vmem>>, vector<2x4x4xf32>
      tpu.vector_store %arg5[%c0_15, %c0_16, %c0_17], %12 {strides = array<i32>} : memref<2x4x4xf32, #tpu.memory_space<vmem>>, vector<2x4x4xf32>,
    } else {
    }
    %c0 = arith.constant 0 : index
    %c0_1 = arith.constant 0 : index
    %c0_2 = arith.constant 0 : index
    %3 = vector.load %arg5[%c0, %c0_1, %c0_2] : memref<2x4x4xf32, #tpu.memory_space<vmem>>, vector<2x4x4xf32>
    %c0_3 = arith.constant 0 : index
    %c0_4 = arith.constant 0 : index
    %c0_5 = arith.constant 0 : index
    %4 = vector.load %arg2[%c0_3, %c0_4, %c0_5] : memref<2x4x256xf32, #tpu.memory_space<vmem>>, vector<2x4x256xf32>
    %c0_6 = arith.constant 0 : index
    %c0_7 = arith.constant 0 : index
    %c0_8 = arith.constant 0 : index
    %5 = vector.load %arg3[%c0_6, %c0_7, %c0_8] : memref<2x4x256xf32, #tpu.memory_space<vmem>>, vector<2x4x256xf32>
    "tpu.trace_start"() <{level = 10 : i32, message = "bdn,ben->bde"}> : () -> ()
    %cst = arith.constant dense<0.000000e+00> : vector<2x4x4xf32>
    %6 = tpu.matmul %4, %5, %cst {dimension_numbers = #tpu.dot_dimension_numbers<[2], [2], [1], [1], [0, 0, 0, 1, 1, 1], [0], [0]>} : vector<2x4x256xf32>, vector<2x4x256xf32>, vector<2x4x4xf32> -> vector<2x4x4xf32>
    "tpu.trace_stop"() : () -> ()
    %7 = arith.addf %3, %6 : vector<2x4x4xf32>
    %c0_9 = arith.constant 0 : index
    %c0_10 = arith.constant 0 : index
    %c0_11 = arith.constant 0 : index
    %8 = vector.load %arg5[%c0_9, %c0_10, %c0_11] : memref<2x4x4xf32, #tpu.memory_space<vmem>>, vector<2x4x4xf32>
    tpu.vector_store %arg5[%c0_9, %c0_10, %c0_11], %7 {strides = array<i32>} : memref<2x4x4xf32, #tpu.memory_space<vmem>>, vector<2x4x4xf32>,
    %c0_i32_12 = arith.constant 0 : i32
    %9 = arith.cmpi eq, %arg1, %c0_i32_12 : i32
    %10 = arith.extui %9 : i1 to i32
    %c0_i32_13 = arith.constant 0 : i32
    %11 = arith.cmpi ne, %10, %c0_i32_13 : i32
    scf.if %11 {
      %c0_14 = arith.constant 0 : index
      %c0_15 = arith.constant 0 : index
      %c0_16 = arith.constant 0 : index
      %12 = vector.load %arg5[%c0_14, %c0_15, %c0_16] : memref<2x4x4xf32, #tpu.memory_space<vmem>>, vector<2x4x4xf32>
      %cst_17 = arith.constant dense<0xFF800000> : vector<2x4xf32>
      %13 = vector.multi_reduction <maximumf>, %12, %cst_17 [2] : vector<2x4x4xf32> to vector<2x4xf32>
      %14 = vector.shape_cast %13 : vector<2x4xf32> to vector<2x4x1xf32>
      %15 = vector.broadcast %14 : vector<2x4x1xf32> to vector<2x4x4xf32>
      %16 = arith.subf %12, %15 : vector<2x4x4xf32>
      %17 = math.exp %16 : vector<2x4x4xf32>
      %cst_18 = arith.constant dense<0.000000e+00> : vector<2x4xf32>
      %18 = vector.multi_reduction <add>, %17, %cst_18 [2] : vector<2x4x4xf32> to vector<2x4xf32>
      %19 = vector.shape_cast %18 : vector<2x4xf32> to vector<2x4x1xf32>
      %20 = tpu.reciprocal %19 {approx = true} : vector<2x4x1xf32> -> vector<2x4x1xf32>
      %21 = arith.mulf %19, %20 : vector<2x4x1xf32>
      %cst_19 = arith.constant 2.000000e+00 : f32
      %22 = vector.broadcast %cst_19 : f32 to vector<2x4x1xf32>
      %23 = arith.subf %22, %21 : vector<2x4x1xf32>
      %24 = arith.mulf %20, %23 : vector<2x4x1xf32>
      %25 = vector.broadcast %24 : vector<2x4x1xf32> to vector<2x4x4xf32>
      %26 = arith.mulf %17, %25 : vector<2x4x4xf32>
      %c0_20 = arith.constant 0 : index
      %c0_21 = arith.constant 0 : index
      %c0_22 = arith.constant 0 : index
      %27 = vector.load %arg4[%c0_20, %c0_21, %c0_22] : memref<2x4x4xf32, #tpu.memory_space<vmem>>, vector<2x4x4xf32>
      tpu.vector_store %arg4[%c0_20, %c0_21, %c0_22], %26 {strides = array<i32>} : memref<2x4x4xf32, #tpu.memory_space<vmem>>, vector<2x4x4xf32>,
    } else {
    }
    return
  }
  func.func @transform_0(%arg0: i32, %arg1: i32) -> (i32, i32, i32) {
    %c0_i32 = arith.constant 0 : i32
    %c0_i32_0 = arith.constant 0 : i32
    return %arg0, %c0_i32, %arg1 : i32, i32, i32
  }
  func.func @transform_1(%arg0: i32, %arg1: i32) -> (i32, i32, i32) {
    %c0_i32 = arith.constant 0 : i32
    %c0_i32_0 = arith.constant 0 : i32
    return %arg0, %c0_i32, %arg1 : i32, i32, i32
  }
  func.func @transform_2(%arg0: i32, %arg1: i32) -> (i32, i32, i32) {
    %c0_i32 = arith.constant 0 : i32
    %c0_i32_0 = arith.constant 0 : i32
    %c0_i32_1 = arith.constant 0 : i32
    return %arg0, %c0_i32, %c0_i32_0 : i32, i32, i32
  }
}

</mosaic_0001>

<llo_original>
// kernel: tpu_custom_call.1
$region0: #{tpu_custom_call.1}
  #allocation0 [shape = 'u32[]', space=smem, size = 0x4, offset = 0x4, fixed_abs, tag = 'smem constant byte address 0x4 - core index']
  #allocation1 [shape = 'u32[144,128]{1,0:T(1,128)}', space=vmem, size = 0x12000, scoped, tag = 'internal scratch']
  #allocation2 [shape = 'f32[2,4,4]{2,1,0:T(4,128)}', space=vmem, size = 0x1000, scoped, tag = 'scratch operand']
  %s0 = inlined_call_operand.hbm [shape: f32[2,4,256], index: 0, kind: input, shape index: {}]
  %s1 = inlined_call_operand.hbm [shape: f32[2,4,256], index: 1, kind: input, shape index: {}]
  %s2 = inlined_call_operand.hbm [shape: f32[2,4,4], index: 2, kind: output, shape index: {}]
  %s3 = sld [smem:[#allocation0]]
  $region34: #{tpu_custom_call.1} parent=0
    _
  %s5 = ssub.s32 1, %s3
  %s6 = scalar_select 0, %s5, %s3
  $region1: #{tpu_custom_call.1} parent=0
    #allocation3 [shape = 'u8[8192]{0}', space=vmem, size = 0x2000, scoped, tag = 'input window, operand 0, single buffered']
    #allocation4 [shape = 's32[1]{0}', space=sflag, size = 0x4, scoped, tag = 'scoped memory for tpu_custom_call.1']
    #allocation5 [shape = 's32[1]{0}', space=sflag, size = 0x4, scoped, tag = 'scoped memory for tpu_custom_call.1']
    #allocation6 [shape = 'u8[8192]{0}', space=vmem, size = 0x2000, scoped, tag = 'input window, operand 1, single buffered']
    #allocation7 [shape = 's32[1]{0}', space=sflag, size = 0x4, scoped, tag = 'scoped memory for tpu_custom_call.1']
    #allocation8 [shape = 'u8[4096]{0}', space=vmem, size = 0x1000, scoped, tag = 'output window, operand 0, single buffered']
    %7 = vsyncpa [#allocation4], 0
    %8 = vsyncpa [#allocation7], 0
    %9 = vsyncpa [#allocation5], 0
    // Predicated region
    $region2: #{tpu_custom_call.1} parent=1 // pred_check
      _
    $region3: #{tpu_custom_call.1} parent=1 // pred_check_branch
      %11 = sbr.rel (0) target = $region5
    $region4: #{tpu_custom_call.1} parent=1 // pred_region
      %s13 = ssub.s32 256, 256
      %14 = vsyncadd [#allocation4], %s13
      %s15 = sshll.u32 [#allocation3], 4
      %s16 = int_to_ptr.vmem [resolvable:$true] %s15
      %21 = dma.hbm_to_vmem [thread:$0]  %s0, 256, %s16, [#allocation4], 128, 128, 8
    $region5: #{tpu_custom_call.1} parent=1 // pred_fallthru
      _
    // Predicated region
    $region6: #{tpu_custom_call.1} parent=1 // pred_check
      _
    $region7: #{tpu_custom_call.1} parent=1 // pred_check_branch
      %23 = sbr.rel (0) target = $region9
    $region8: #{tpu_custom_call.1} parent=1 // pred_region
      %s25 = ssub.s32 256, 256
      %26 = vsyncadd [#allocation7], %s25
      %s27 = sshll.u32 [#allocation6], 4
      %s28 = int_to_ptr.vmem [resolvable:$true] %s27
      %33 = dma.hbm_to_vmem [thread:$0]  %s1, 256, %s28, [#allocation7], 128, 128, 8
    $region9: #{tpu_custom_call.1} parent=1 // pred_fallthru
      _
    // Predicated region
    $region10: #{tpu_custom_call.1} parent=1 // pred_check
      _
    $region11: #{tpu_custom_call.1} parent=1 // pred_check_branch
      %35 = sbr.rel (0) target = $region13
    $region12: #{tpu_custom_call.1} parent=1 // pred_region
      %36 = dma.done [#allocation4], 256
    $region13: #{tpu_custom_call.1} parent=1 // pred_fallthru
      _
    // Predicated region
    $region14: #{tpu_custom_call.1} parent=1 // pred_check
      _
    $region15: #{tpu_custom_call.1} parent=1 // pred_check_branch
      %38 = sbr.rel (0) target = $region17
    $region16: #{tpu_custom_call.1} parent=1 // pred_region
      %39 = dma.done [#allocation7], 256
    $region17: #{tpu_custom_call.1} parent=1 // pred_fallthru
      _
    %p40 = scmp.eq.s32.totalorder 0, 0
    // Predicated region
    $region18: #{tpu_custom_call.1} parent=1 // pred_check
      %p41 = pneg %p40
    $region19: #{tpu_custom_call.1} parent=1 // pred_check_branch
      %43 = sbr.rel (%p41) target = $region21
    $region20: #{tpu_custom_call.1} parent=1 // pred_region
      %vm44 = vcmask 27648
      %45 = vst.msk [vmem:[#allocation2] sm:$0xf] %vm44, 0.0
      %46 = vst.msk [vmem:[#allocation2 + $0x4] sm:$0xf] %vm44, 0.0
    $region21: #{tpu_custom_call.1} parent=1 // pred_fallthru
      _
    %v47 = vld [vmem:[#allocation2] sm:$0xf]
    %v48 = vld [vmem:[#allocation2 + $0x4] sm:$0xf]
    %v49 = vld [vmem:[#allocation3] sm:$0xff]
    %v50 = vld [vmem:[#allocation3 + $0x8] sm:$0xff]
    %v51 = vld [vmem:[#allocation6] sm:$0xff]
    %v52 = vld [vmem:[#allocation6 + $0x8] sm:$0xff]
    %v54 = vcombine.high %v49, %v49
    %v57 = vcombine.high %v51, %v51
    %59 = vmatprep.subr.mxu0 0.0
    %60 = vmatpush1.xpose.msra.mxu0 0.0
    %61 = vmatprep.subr.mxu0 0.0
    %62 = vmatpush1.xpose.msra.mxu0 0.0
    %63 = vmatprep.subr.mxu0 0.0
    %64 = vmatpush1.xpose.msra.mxu0 0.0
    %65 = vmatprep.subr.mxu0 0.0
    %66 = vmatpush1.xpose.msra.mxu0 0.0
    %67 = vmatprep.subr.mxu0 0.0
    %68 = vmatpush1.xpose.msra.mxu0 0.0
    %69 = vmatprep.subr.mxu0 0.0
    %70 = vmatpush1.xpose.msra.mxu0 0.0
    %71 = vmatprep.subr.mxu0 0.0
    %72 = vmatpush1.xpose.msra.mxu0 0.0
    %73 = vmatprep.subr.mxu0 0.0
    %74 = vmatpush1.xpose.msra.mxu0 0.0
    %75 = vmatprep.subr.mxu0 0.0
    %76 = vmatpush1.xpose.msra.mxu0 0.0
    %77 = vmatprep.subr.mxu0 0.0
    %78 = vmatpush1.xpose.msra.mxu0 0.0
    %79 = vmatprep.subr.mxu0 0.0
    %80 = vmatpush1.xpose.msra.mxu0 0.0
    %81 = vmatprep.subr.mxu0 0.0
    %82 = vmatpush1.xpose.msra.mxu0 0.0
    %83 = vmatprep.subr.mxu0 0.0
    %84 = vmatpush1.xpose.msra.mxu0 0.0
    %85 = vmatprep.subr.mxu0 0.0
    %86 = vmatpush1.xpose.msra.mxu0 0.0
    %87 = vmatprep.subr.mxu0 0.0
    %88 = vmatpush1.xpose.msra.mxu0 0.0
    %89 = vmatprep.subr.mxu0 %v57
    %90 = vmatpush1.xpose.msra.mxu0 %v51
    %91 = vmatprep.subr.mxu0 0.0
    %92 = vmatpush2.xpose.msra.mxu0 0.0
    %93 = vmatprep.subr.mxu0 0.0
    %94 = vmatpush2.xpose.msra.mxu0 0.0
    %95 = vmatprep.subr.mxu0 0.0
    %96 = vmatpush2.xpose.msra.mxu0 0.0
    %97 = vmatprep.subr.mxu0 0.0
    %98 = vmatpush2.xpose.msra.mxu0 0.0
    %99 = vmatprep.subr.mxu0 0.0
    %100 = vmatpush2.xpose.msra.mxu0 0.0
    %101 = vmatprep.subr.mxu0 0.0
    %102 = vmatpush2.xpose.msra.mxu0 0.0
    %103 = vmatprep.subr.mxu0 0.0
    %104 = vmatpush2.xpose.msra.mxu0 0.0
    %105 = vmatprep.subr.mxu0 0.0
    %106 = vmatpush2.xpose.msra.mxu0 0.0
    %107 = vmatprep.subr.mxu0 0.0
    %108 = vmatpush2.xpose.msra.mxu0 0.0
    %109 = vmatprep.subr.mxu0 0.0
    %110 = vmatpush2.xpose.msra.mxu0 0.0
    %111 = vmatprep.subr.mxu0 0.0
    %112 = vmatpush2.xpose.msra.mxu0 0.0
    %113 = vmatprep.subr.mxu0 0.0
    %114 = vmatpush2.xpose.msra.mxu0 0.0
    %115 = vmatprep.subr.mxu0 0.0
    %116 = vmatpush2.xpose.msra.mxu0 0.0
    %117 = vmatprep.subr.mxu0 0.0
    %118 = vmatpush2.xpose.msra.mxu0 0.0
    %119 = vmatprep.subr.mxu0 0.0
    %120 = vmatpush2.xpose.msra.mxu0 0.0
    %121 = vmatprep.subr.mxu0 0.0
    %122 = vmatpush2.xpose.msra.mxu0 0.0
    %123 = vmatprep.mubr.f32.mxu0 %v54
    %124 = vmatmul.mubr.f32.gmra.mxu0 %v49
    %v125 = vpop.f32.mrf.mxu0
    %v126 = vadd.f32 0.0, %v125
    %v127 = vpop.f32.mrf.mxu0
    %128 = vdwg.mxu0
    %v130 = vcombine.high %v50, %v50
    %v133 = vcombine.high %v52, %v52
    %135 = vmatprep.subr.mxu0 0.0
    %136 = vmatpush1.xpose.msra.mxu0 0.0
    %137 = vmatprep.subr.mxu0 0.0
    %138 = vmatpush1.xpose.msra.mxu0 0.0
    %139 = vmatprep.subr.mxu0 0.0
    %140 = vmatpush1.xpose.msra.mxu0 0.0
    %141 = vmatprep.subr.mxu0 0.0
    %142 = vmatpush1.xpose.msra.mxu0 0.0
    %143 = vmatprep.subr.mxu0 0.0
    %144 = vmatpush1.xpose.msra.mxu0 0.0
    %145 = vmatprep.subr.mxu0 0.0
    %146 = vmatpush1.xpose.msra.mxu0 0.0
    %147 = vmatprep.subr.mxu0 0.0
    %148 = vmatpush1.xpose.msra.mxu0 0.0
    %149 = vmatprep.subr.mxu0 0.0
    %150 = vmatpush1.xpose.msra.mxu0 0.0
    %151 = vmatprep.subr.mxu0 0.0
    %152 = vmatpush1.xpose.msra.mxu0 0.0
    %153 = vmatprep.subr.mxu0 0.0
    %154 = vmatpush1.xpose.msra.mxu0 0.0
    %155 = vmatprep.subr.mxu0 0.0
    %156 = vmatpush1.xpose.msra.mxu0 0.0
    %157 = vmatprep.subr.mxu0 0.0
    %158 = vmatpush1.xpose.msra.mxu0 0.0
    %159 = vmatprep.subr.mxu0 0.0
    %160 = vmatpush1.xpose.msra.mxu0 0.0
    %161 = vmatprep.subr.mxu0 0.0
    %162 = vmatpush1.xpose.msra.mxu0 0.0
    %163 = vmatprep.subr.mxu0 0.0
    %164 = vmatpush1.xpose.msra.mxu0 0.0
    %165 = vmatprep.subr.mxu0 %v133
    %166 = vmatpush1.xpose.msra.mxu0 %v52
    %167 = vmatprep.subr.mxu0 0.0
    %168 = vmatpush2.xpose.msra.mxu0 0.0
    %169 = vmatprep.subr.mxu0 0.0
    %170 = vmatpush2.xpose.msra.mxu0 0.0
    %171 = vmatprep.subr.mxu0 0.0
    %172 = vmatpush2.xpose.msra.mxu0 0.0
    %173 = vmatprep.subr.mxu0 0.0
    %174 = vmatpush2.xpose.msra.mxu0 0.0
    %175 = vmatprep.subr.mxu0 0.0
    %176 = vmatpush2.xpose.msra.mxu0 0.0
    %177 = vmatprep.subr.mxu0 0.0
    %178 = vmatpush2.xpose.msra.mxu0 0.0
    %179 = vmatprep.subr.mxu0 0.0
    %180 = vmatpush2.xpose.msra.mxu0 0.0
    %181 = vmatprep.subr.mxu0 0.0
    %182 = vmatpush2.xpose.msra.mxu0 0.0
    %183 = vmatprep.subr.mxu0 0.0
    %184 = vmatpush2.xpose.msra.mxu0 0.0
    %185 = vmatprep.subr.mxu0 0.0
    %186 = vmatpush2.xpose.msra.mxu0 0.0
    %187 = vmatprep.subr.mxu0 0.0
    %188 = vmatpush2.xpose.msra.mxu0 0.0
    %189 = vmatprep.subr.mxu0 0.0
    %190 = vmatpush2.xpose.msra.mxu0 0.0
    %191 = vmatprep.subr.mxu0 0.0
    %192 = vmatpush2.xpose.msra.mxu0 0.0
    %193 = vmatprep.subr.mxu0 0.0
    %194 = vmatpush2.xpose.msra.mxu0 0.0
    %195 = vmatprep.subr.mxu0 0.0
    %196 = vmatpush2.xpose.msra.mxu0 0.0
    %197 = vmatprep.subr.mxu0 0.0
    %198 = vmatpush2.xpose.msra.mxu0 0.0
    %199 = vmatprep.mubr.f32.mxu0 %v130
    %200 = vmatmul.mubr.f32.gmra.mxu0 %v50
    %v201 = vpop.f32.mrf.mxu0
    %v202 = vadd.f32 0.0, %v201
    %v203 = vpop.f32.mrf.mxu0
    %204 = vdwg.mxu0
    %v205 = vadd.f32 %v47, %v126
    %v206 = vadd.f32 %v48, %v202
    %vm207 = vcmask 27648
    %208 = vst.msk [vmem:[#allocation2] sm:$0xf] %vm207, %v205
    %209 = vst.msk [vmem:[#allocation2 + $0x4] sm:$0xf] %vm207, %v206
    // Predicated region
    $region22: #{tpu_custom_call.1} parent=1 // pred_check
      %p210 = pneg %p40
    $region23: #{tpu_custom_call.1} parent=1 // pred_check_branch
      %212 = sbr.rel (%p210) target = $region25
    $region24: #{tpu_custom_call.1} parent=1 // pred_region
      %v213 = vld [vmem:[#allocation2] sm:$0xf]
      %v214 = vld [vmem:[#allocation2 + $0x4] sm:$0xf]
      %v215 = vsel %vm207, %v213, -inf
      %216 = vmax.xlane.f32.xlu0 %v215
      %v217 = vpop.xlane.xlu0 %216
      %v218 = vsel %vm207, %v214, -inf
      %219 = vmax.xlane.f32.xlu0 %v218
      %v220 = vpop.xlane.xlu0 %219
      %v221 = vsub.f32 %v213, %v217
      %v222 = vsub.f32 %v214, %v220
      %v223 = vmul.f32 %v221, 1.442695
      %v224 = vpow.pop %v223
      %v225 = vmul.f32 %v222, 1.442695
      %v226 = vpow.pop %v225
      %v227 = vsel %vm207, %v224, 0.0
      %228 = vadd.xlane.f32.xlu0 %v227
      %v229 = vpop.xlane.xlu0 %228
      %v230 = vsel %vm207, %v226, 0.0
      %231 = vadd.xlane.f32.xlu0 %v230
      %v232 = vpop.xlane.xlu0 %231
      %v233 = vrcp.pop %v229
      %v234 = vrcp.pop %v232
      %v235 = vmul.f32 %v229, %v233
      %v236 = vmul.f32 %v232, %v234
      %v237 = vsub.f32 2.0, %v235
      %v238 = vsub.f32 2.0, %v236
      %v239 = vmul.f32 %v233, %v237
      %v240 = vmul.f32 %v234, %v238
      %v241 = vmul.f32 %v224, %v239
      %v242 = vmul.f32 %v226, %v240
      %243 = vst.msk [vmem:[#allocation8] sm:$0xf] %vm207, %v241
      %244 = vst.msk [vmem:[#allocation8 + $0x4] sm:$0xf] %vm207, %v242
    $region25: #{tpu_custom_call.1} parent=1 // pred_fallthru
      _
    // Predicated region
    $region26: #{tpu_custom_call.1} parent=1 // pred_check
      _
    $region27: #{tpu_custom_call.1} parent=1 // pred_check_branch
      %246 = sbr.rel (0) target = $region29
    $region28: #{tpu_custom_call.1} parent=1 // pred_region
      %s248 = ssub.s32 128, 128
      %249 = vsyncadd [#allocation5], %s248
      %s250 = sshll.u32 [#allocation8], 4
      %s251 = int_to_ptr.vmem [resolvable:$true] %s250
      %256 = dma.vmem_to_hbm [thread:$0]  %s251, 128, %s2, [#allocation5], 64, 64, 4
    $region29: #{tpu_custom_call.1} parent=1 // pred_fallthru
      _
    // Predicated region
    $region30: #{tpu_custom_call.1} parent=1 // pred_check
      _
    $region31: #{tpu_custom_call.1} parent=1 // pred_check_branch
      %258 = sbr.rel (0) target = $region33
    $region32: #{tpu_custom_call.1} parent=1 // pred_region
      %259 = dma.done [#allocation5], 128
    $region33: #{tpu_custom_call.1} parent=1 // pred_fallthru
      _
    %260 = vsyncpa [#allocation4], 1
    %261 = vsyncpa [#allocation7], 1
    %262 = vsyncpa [#allocation5], 1

</llo_original>
